<compile_context>
chip_gen: v7x
topology: tpu7x:2x2x1
jax: 0.10.0
libtpu: 0.0.40
codegen_flags: <defaults>
</compile_context>

<pallas_src>
import functools
import math

import jax
import jax.numpy as jnp
from jax.experimental import pallas as pl
from jax.experimental.pallas import tpu as pltpu

LANE = 128


def _round_up(v, m):
    return (v + m - 1) // m * m


def _fused_gcn_kernel(x_ref, w1_ref, b1_ref, w2_ref, b2_ref, adj_ref,
                      o_ref, s2_ref, *, tm):
    """Two-phase fused 2-layer GCN.

    grid = (2, num_row_tiles).  Phase 0 writes
    support2[i] = relu(adj_i @ x @ W1 + b1) @ W2 into the VMEM scratch;
    phase 1 emits out_i = adj_i @ support2 + b2.
    """
    phase = pl.program_id(0)
    i = pl.program_id(1)
    adj_t = adj_ref[...]                      # (TM, N_pad) bf16 row tile

    @pl.when(phase == 0)
    def _layer1():
        # (adj @ x) @ W1 : contract through the input-feature width first.
        ax = jnp.dot(adj_t, x_ref[...], preferred_element_type=jnp.float32)
        h = jnp.dot(ax.astype(jnp.bfloat16), w1_ref[...],
                    preferred_element_type=jnp.float32)
        h = jnp.maximum(h + b1_ref[...], 0.0)
        # TODO(synk): training-mode F.dropout (random mask) not reproduced;
        #             eval-mode identity semantics are implemented.
        s2 = jnp.dot(h.astype(jnp.bfloat16), w2_ref[...],
                     preferred_element_type=jnp.float32)
        row0 = pl.multiple_of(i * tm, tm)
        s2_ref[pl.ds(row0, tm), :] = s2.astype(s2_ref.dtype)
        # The output block is also mapped in phase 0; give it a defined value
        # (phase 1 revisits the same block and overwrites it with the result).
        o_ref[...] = jnp.zeros_like(o_ref)

    @pl.when(phase == 1)
    def _layer2():
        out = jnp.dot(adj_t, s2_ref[...], preferred_element_type=jnp.float32)
        o_ref[...] = (out + b2_ref[...]).astype(o_ref.dtype)


def gcn_forward_pallas(params, x, adj):
    """Fused forward: relu(adj @ x @ W1 + b1) -> adj @ (.) @ W2 + b2."""
    n, nfeat = x.shape
    nhid = params["w1"].shape[1]
    nclass = params["w2"].shape[1]
    assert adj.shape == (n, n)
    assert params["b1"].shape == (1, nhid) and params["b2"].shape == (1, nclass)

    # Lane-dense padding: every matmul / store dim is a multiple of 128.
    n_p = _round_up(n, LANE)
    fin_p = _round_up(nfeat, LANE)
    h_p = _round_up(nhid, LANE)
    c_p = _round_up(nclass, LANE)

    # adj row-tile size (double-buffered by the BlockSpec pipeline).  256 keeps
    # 2 * TM * N_pad * 2B comfortably inside v7x's 64 MiB VMEM for realistic N;
    # fall back to 128 so n_p % tm == 0 always holds.
    tm = 256 if n_p % 256 == 0 else LANE
    num_tiles = n_p // tm

    bf16 = jnp.bfloat16
    x_p = jnp.zeros((n_p, fin_p), bf16).at[:n, :nfeat].set(x.astype(bf16))
    adj_p = jnp.zeros((n_p, n_p), bf16).at[:n, :n].set(adj.astype(bf16))
    w1_p = jnp.zeros((fin_p, h_p), bf16).at[:nfeat, :nhid].set(
        params["w1"].astype(bf16))
    w2_p = jnp.zeros((h_p, c_p), bf16).at[:nhid, :nclass].set(
        params["w2"].astype(bf16))
    b1_p = jnp.zeros((1, h_p), jnp.float32).at[:, :nhid].set(params["b1"])
    b2_p = jnp.zeros((1, c_p), jnp.float32).at[:, :nclass].set(params["b2"])

    flops = (2 * n_p * n_p * fin_p        # adj @ x
             + 2 * n_p * fin_p * h_p      # (.) @ W1
             + 2 * n_p * h_p * c_p        # h @ W2
             + 2 * n_p * n_p * c_p)       # adj @ support2
    bytes_accessed = (2 * n_p * n_p * 2               # adj, once per phase (bf16)
                      + n_p * fin_p * 2               # x
                      + (fin_p * h_p + h_p * c_p) * 2  # weights
                      + (h_p + c_p) * 4                # biases
                      + n_p * c_p * 4)                 # output (f32)

    kernel = functools.partial(_fused_gcn_kernel, tm=tm)
    out_p = pl.pallas_call(
        kernel,
        out_shape=jax.ShapeDtypeStruct((n_p, c_p), jnp.float32),
        grid=(2, num_tiles),
        in_specs=[
            pl.BlockSpec((n_p, fin_p), lambda p, i: (0, 0)),   # x   (resident)
            pl.BlockSpec((fin_p, h_p), lambda p, i: (0, 0)),   # W1  (resident)
            pl.BlockSpec((1, h_p), lambda p, i: (0, 0)),       # b1
            pl.BlockSpec((h_p, c_p), lambda p, i: (0, 0)),     # W2  (resident)
            pl.BlockSpec((1, c_p), lambda p, i: (0, 0)),       # b2
            pl.BlockSpec((tm, n_p), lambda p, i: (i, 0)),      # adj row tile
        ],
        out_specs=pl.BlockSpec((tm, c_p), lambda p, i: (i, 0)),
        scratch_shapes=[pltpu.VMEM((n_p, c_p), bf16)],          # support2
        compiler_params=pltpu.CompilerParams(
            # Phase 1 of every row tile depends on ALL phase-0 tiles through
            # the VMEM scratch, so neither grid axis can be megacore-parallel.
            # TODO(synk): a v7x 2-TC split would need a cross-core barrier.
            dimension_semantics=("arbitrary", "arbitrary"),
        ),
        cost_estimate=pl.CostEstimate(
            flops=flops, transcendentals=0, bytes_accessed=bytes_accessed),
    )(x_p, w1_p, b1_p, w2_p, b2_p, adj_p)

    return out_p[:n, :nclass]


def init_gcn_params(key, nfeat, nhid, nclass):
    """Matches GraphConvolution.reset_parameters: U(-stdv, stdv), stdv=1/sqrt(out)."""
    k1, k2, k3, k4 = jax.random.split(key, 4)
    stdv1 = 1.0 / math.sqrt(nhid)
    stdv2 = 1.0 / math.sqrt(nclass)
    return {
        "w1": jax.random.uniform(k1, (nfeat, nhid), jnp.float32, -stdv1, stdv1),
        "b1": jax.random.uniform(k2, (1, nhid), jnp.float32, -stdv1, stdv1),
        "w2": jax.random.uniform(k3, (nhid, nclass), jnp.float32, -stdv2, stdv2),
        "b2": jax.random.uniform(k4, (1, nclass), jnp.float32, -stdv2, stdv2),
    }


@jax.jit
def gcn_forward(params, x, adj):
    return gcn_forward_pallas(params, x, adj)


def _reference(params, x, adj):
    h = jnp.maximum(adj @ (x @ params["w1"]) + params["b1"], 0.0)
    return adj @ (h @ params["w2"]) + params["b2"]


if __name__ == "__main__":
    # Small synthetic problem: N=64 nodes, nfeat=16, nhid=32, nclass=8.
    N, NFEAT, NHID, NCLASS = 64, 16, 32, 8

    key = jax.random.PRNGKey(0)
    k_params, k_x, k_adj = jax.random.split(key, 3)

    params = init_gcn_params(k_params, NFEAT, NHID, NCLASS)

    x = jax.random.normal(k_x, (N, NFEAT), jnp.float32)
    # Symmetric, row-normalized adjacency with self-loops (typical GCN input).
    a = (jax.random.uniform(k_adj, (N, N)) < 0.1).astype(jnp.float32)
    a = jnp.maximum(a, a.T) + jnp.eye(N, dtype=jnp.float32)
    adj = a / jnp.sum(a, axis=1, keepdims=True)

    out = gcn_forward(params, x, adj)
    out = jax.block_until_ready(out)

    ref = _reference(params, x, adj)
    assert out.shape == (N, NCLASS)
    # bf16 matmul inputs (f32 accumulation) -> loosened tolerance.
    assert jnp.allclose(out, ref, atol=5e-2, rtol=5e-2), (
        float(jnp.max(jnp.abs(out - ref))))

    print("KERNEL_OK")
</pallas_src>

<mosaic_0001>
module attributes {stable_mosaic.version = 11 : i64} {
  func.func @_fused_gcn_kernel(%arg0: i32, %arg1: i32, %arg2: memref<128x128xbf16, #tpu.memory_space<vmem>>, %arg3: memref<128x128xbf16, #tpu.memory_space<vmem>>, %arg4: memref<1x128xf32, #tpu.memory_space<vmem>>, %arg5: memref<128x128xbf16, #tpu.memory_space<vmem>>, %arg6: memref<1x128xf32, #tpu.memory_space<vmem>>, %arg7: memref<128x128xbf16, #tpu.memory_space<vmem>>, %arg8: memref<128x128xf32, #tpu.memory_space<vmem>>, %arg9: memref<128x128xbf16, #tpu.memory_space<vmem>>) attributes {dimension_semantics = [#tpu.dimension_semantics<arbitrary>, #tpu.dimension_semantics<arbitrary>], iteration_bounds = array<i64: 2, 1>, scalar_prefetch = 0 : i64, scratch_operands = 1 : i64, tpu.core_type = #tpu.core_type<tc>, window_params = [{pipeline_mode = #tpu.pipeline_mode<synchronous>, transform_indices = @transform_0, window_bounds = array<i64: 128, 128>}, {pipeline_mode = #tpu.pipeline_mode<synchronous>, transform_indices = @transform_1, window_bounds = array<i64: 128, 128>}, {pipeline_mode = #tpu.pipeline_mode<synchronous>, transform_indices = @transform_2, window_bounds = array<i64: 1, 128>}, {pipeline_mode = #tpu.pipeline_mode<synchronous>, transform_indices = @transform_3, window_bounds = array<i64: 128, 128>}, {pipeline_mode = #tpu.pipeline_mode<synchronous>, transform_indices = @transform_4, window_bounds = array<i64: 1, 128>}, {transform_indices = @transform_5, window_bounds = array<i64: 128, 128>}, {transform_indices = @transform_6, window_bounds = array<i64: 128, 128>}]} {
    %c0 = arith.constant 0 : index
    %c0_0 = arith.constant 0 : index
    %0 = vector.load %arg7[%c0, %c0_0] : memref<128x128xbf16, #tpu.memory_space<vmem>>, vector<128x128xbf16>
    %c0_i32 = arith.constant 0 : i32
    %1 = arith.cmpi eq, %arg0, %c0_i32 : i32
    %2 = arith.extui %1 : i1 to i32
    %c0_i32_1 = arith.constant 0 : i32
    %3 = arith.cmpi ne, %2, %c0_i32_1 : i32
    scf.if %3 {
      %c0_3 = arith.constant 0 : index
      %c0_4 = arith.constant 0 : index
      %7 = vector.load %arg2[%c0_3, %c0_4] : memref<128x128xbf16, #tpu.memory_space<vmem>>, vector<128x128xbf16>
      %cst = arith.constant dense<0.000000e+00> : vector<128x128xf32>
      %8 = tpu.matmul %0, %7, %cst {dimension_numbers = #tpu.dot_dimension_numbers<[1], [0], [0], [1], [0, 0, 1, 1], [], []>} : vector<128x128xbf16>, vector<128x128xbf16>, vector<128x128xf32> -> vector<128x128xf32>
      %9 = arith.truncf %8 : vector<128x128xf32> to vector<128x128xbf16>
      %c0_5 = arith.constant 0 : index
      %c0_6 = arith.constant 0 : index
      %10 = vector.load %arg3[%c0_5, %c0_6] : memref<128x128xbf16, #tpu.memory_space<vmem>>, vector<128x128xbf16>
      %cst_7 = arith.constant dense<0.000000e+00> : vector<128x128xf32>
      %11 = tpu.matmul %9, %10, %cst_7 {dimension_numbers = #tpu.dot_dimension_numbers<[1], [0], [0], [1], [0, 0, 1, 1], [], []>} : vector<128x128xbf16>, vector<128x128xbf16>, vector<128x128xf32> -> vector<128x128xf32>
      %c0_8 = arith.constant 0 : index
      %c0_9 = arith.constant 0 : index
      %12 = vector.load %arg4[%c0_8, %c0_9] : memref<1x128xf32, #tpu.memory_space<vmem>>, vector<1x128xf32>
      %13 = vector.broadcast %12 : vector<1x128xf32> to vector<128x128xf32>
      %14 = arith.addf %11, %13 : vector<128x128xf32>
      %cst_10 = arith.constant 0.000000e+00 : f32
      %15 = vector.broadcast %cst_10 : f32 to vector<128x128xf32>
      %16 = arith.maximumf %14, %15 : vector<128x128xf32>
      %17 = arith.truncf %16 : vector<128x128xf32> to vector<128x128xbf16>
      %c0_11 = arith.constant 0 : index
      %c0_12 = arith.constant 0 : index
      %18 = vector.load %arg5[%c0_11, %c0_12] : memref<128x128xbf16, #tpu.memory_space<vmem>>, vector<128x128xbf16>
      %cst_13 = arith.constant dense<0.000000e+00> : vector<128x128xf32>
      %19 = tpu.matmul %17, %18, %cst_13 {dimension_numbers = #tpu.dot_dimension_numbers<[1], [0], [0], [1], [0, 0, 1, 1], [], []>} : vector<128x128xbf16>, vector<128x128xbf16>, vector<128x128xf32> -> vector<128x128xf32>
      %c128_i32 = arith.constant 128 : i32
      %20 = arith.muli %arg1, %c128_i32 : i32
      %21 = tpu.assume_multiple %20, 128 : i32
      %22 = arith.truncf %19 : vector<128x128xf32> to vector<128x128xbf16>
      %23 = arith.index_cast %21 : i32 to index
      %c0_14 = arith.constant 0 : index
      %24 = vector.load %arg9[%23, %c0_14] : memref<128x128xbf16, #tpu.memory_space<vmem>>, vector<128x128xbf16>
      tpu.vector_store %arg9[%23, %c0_14], %22 {strides = array<i32>} : memref<128x128xbf16, #tpu.memory_space<vmem>>, vector<128x128xbf16>,
      %cst_15 = arith.constant 0.000000e+00 : f32
      %25 = vector.broadcast %cst_15 : f32 to vector<128x128xf32>
      %c0_16 = arith.constant 0 : index
      %c0_17 = arith.constant 0 : index
      %26 = vector.load %arg8[%c0_16, %c0_17] : memref<128x128xf32, #tpu.memory_space<vmem>>, vector<128x128xf32>
      tpu.vector_store %arg8[%c0_16, %c0_17], %25 {strides = array<i32>} : memref<128x128xf32, #tpu.memory_space<vmem>>, vector<128x128xf32>,
    } else {
    }
    %c1_i32 = arith.constant 1 : i32
    %4 = arith.cmpi eq, %arg0, %c1_i32 : i32
    %5 = arith.extui %4 : i1 to i32
    %c0_i32_2 = arith.constant 0 : i32
    %6 = arith.cmpi ne, %5, %c0_i32_2 : i32
    scf.if %6 {
      %c0_3 = arith.constant 0 : index
      %c0_4 = arith.constant 0 : index
      %7 = vector.load %arg9[%c0_3, %c0_4] : memref<128x128xbf16, #tpu.memory_space<vmem>>, vector<128x128xbf16>
      %cst = arith.constant dense<0.000000e+00> : vector<128x128xf32>
      %8 = tpu.matmul %0, %7, %cst {dimension_numbers = #tpu.dot_dimension_numbers<[1], [0], [0], [1], [0, 0, 1, 1], [], []>} : vector<128x128xbf16>, vector<128x128xbf16>, vector<128x128xf32> -> vector<128x128xf32>
      %c0_5 = arith.constant 0 : index
      %c0_6 = arith.constant 0 : index
      %9 = vector.load %arg6[%c0_5, %c0_6] : memref<1x128xf32, #tpu.memory_space<vmem>>, vector<1x128xf32>
      %10 = vector.broadcast %9 : vector<1x128xf32> to vector<128x128xf32>
      %11 = arith.addf %8, %10 : vector<128x128xf32>
      %c0_7 = arith.constant 0 : index
      %c0_8 = arith.constant 0 : index
      %12 = vector.load %arg8[%c0_7, %c0_8] : memref<128x128xf32, #tpu.memory_space<vmem>>, vector<128x128xf32>
      tpu.vector_store %arg8[%c0_7, %c0_8], %11 {strides = array<i32>} : memref<128x128xf32, #tpu.memory_space<vmem>>, vector<128x128xf32>,
    } else {
    }
    return
  }
  func.func @transform_0(%arg0: i32, %arg1: i32) -> (i32, i32) {
    %c0_i32 = arith.constant 0 : i32
    %c0_i32_0 = arith.constant 0 : i32
    %c0_i32_1 = arith.constant 0 : i32
    return %c0_i32, %c0_i32_0 : i32, i32
  }
  func.func @transform_1(%arg0: i32, %arg1: i32) -> (i32, i32) {
    %c0_i32 = arith.constant 0 : i32
    %c0_i32_0 = arith.constant 0 : i32
    %c0_i32_1 = arith.constant 0 : i32
    return %c0_i32, %c0_i32_0 : i32, i32
  }
  func.func @transform_2(%arg0: i32, %arg1: i32) -> (i32, i32) {
    %c0_i32 = arith.constant 0 : i32
    %c0_i32_0 = arith.constant 0 : i32
    %c0_i32_1 = arith.constant 0 : i32
    return %c0_i32, %c0_i32_0 : i32, i32
  }
  func.func @transform_3(%arg0: i32, %arg1: i32) -> (i32, i32) {
    %c0_i32 = arith.constant 0 : i32
    %c0_i32_0 = arith.constant 0 : i32
    %c0_i32_1 = arith.constant 0 : i32
    return %c0_i32, %c0_i32_0 : i32, i32
  }
  func.func @transform_4(%arg0: i32, %arg1: i32) -> (i32, i32) {
    %c0_i32 = arith.constant 0 : i32
    %c0_i32_0 = arith.constant 0 : i32
    %c0_i32_1 = arith.constant 0 : i32
    return %c0_i32, %c0_i32_0 : i32, i32
  }
  func.func @transform_5(%arg0: i32, %arg1: i32) -> (i32, i32) {
    %c0_i32 = arith.constant 0 : i32
    %c0_i32_0 = arith.constant 0 : i32
    return %arg1, %c0_i32 : i32, i32
  }
  func.func @transform_6(%arg0: i32, %arg1: i32) -> (i32, i32) {
    %c0_i32 = arith.constant 0 : i32
    %c0_i32_0 = arith.constant 0 : i32
    return %arg1, %c0_i32 : i32, i32
  }
}

</mosaic_0001>

<llo_original>
// kernel: gcn_forward.1
$region0: #{gcn_forward.1}
  #allocation0 [shape = 'u32[]', space=smem, size = 0x4, offset = 0x4, fixed_abs, tag = 'smem constant byte address 0x4 - core index']
  #allocation1 [shape = 'u32[144,128]{1,0:T(1,128)}', space=vmem, size = 0x12000, scoped, tag = 'internal scratch']
  #allocation2 [shape = 'bf16[128,128]{1,0:T(16,128)(2,1)}', space=vmem, size = 0x8000, scoped, tag = 'scratch operand']
  %s0 = inlined_call_operand.vmem [shape: bf16[128,128], index: 0, kind: input, shape index: {}]
  %s1 = inlined_call_operand.vmem [shape: bf16[128,128], index: 1, kind: input, shape index: {}]
  %s2 = inlined_call_operand.vmem [shape: f32[1,128], index: 2, kind: input, shape index: {}]
  %s3 = inlined_call_operand.vmem [shape: bf16[128,128], index: 3, kind: input, shape index: {}]
  %s4 = inlined_call_operand.vmem [shape: f32[1,128], index: 4, kind: input, shape index: {}]
  %s5 = inlined_call_operand.vmem [shape: bf16[128,128], index: 5, kind: input, shape index: {}]
  %s6 = inlined_call_operand.vmem [shape: f32[128,128], index: 6, kind: output, shape index: {}]
  %s7 = sld [smem:[#allocation0]]
  $region65: #{gcn_forward.1} parent=0
    _
  %s9 = ssub.s32 1, %s7
  %s10 = scalar_select 0, %s9, %s7
  loop: start=0, step=1, limit=4
  $region2: #{gcn_forward.1} parent=0 // loop_pre_header
    _
  $region3: #{gcn_forward.1} parent=0 // loop_header
    %s12 = sphi 0, %s16
    %p13 = scmp.ge.s32.totalorder %s12, 4
    %s19 = sphi 0, %s31
    %s20 = sphi 0, %s27
    %s21 = sphi 0, %s19
    %s22 = sphi 0, %s20
    %s23 = sphi 0, %s21
    %s24 = sphi 0, %s22
    %s32 = sphi 0, %s32
    %s34 = sphi 0, %s32
    %s35 = sphi 0, %s34
    %s49 = sphi 0, %s35
    %s53 = sphi 0, %s53
    %s55 = sphi 0, %s53
    %s56 = sphi 0, %s55
    %s70 = sphi 0, %s56
    %s74 = sphi 0, %s74
    %s76 = sphi 0, %s74
    %s77 = sphi 0, %s76
    %s91 = sphi 0, %s77
    %s95 = sphi 0, %s95
    %s97 = sphi 0, %s95
    %s98 = sphi 0, %s97
    %s112 = sphi 0, %s98
    %s116 = sphi 0, %s116
    %s118 = sphi 0, %s116
    %s119 = sphi 0, %s118
    %s133 = sphi 0, %s119
    %s139 = sphi 0, %s141
    %s142 = sphi 0, %s139
    %s143 = sphi 0, %s142
    %s159 = sphi 0, %s143
    %s165 = sphi 0, %s167
    %s168 = sphi 0, %s165
    %s169 = sphi 0, %s168
    %s185 = sphi 0, %s169
  $region4: #{gcn_forward.1} parent=0 // loop_header_branch
    %15 = sbr.rel (%p13) target = $region8
  $region5: #{gcn_forward.1} parent=0 // loop_body
    %s17 = ssub.s32 %s12, 1
    %s18 = ssub.s32 %s12, 2
    %s25 = sadd.s32 1, %s20
    %p26 = scmp.ge.s32.totalorder %s25, 1
    %s27 = scalar_select %p26, 0, %s25
    %s28 = sadd.s32 1, %s19
    %s29 = scalar_select %p26, %s28, %s19
    %p30 = scmp.ge.s32.totalorder %s29, 2
    %s31 = scalar_select %p30, 0, %s29
    %s33 = sadd.s32 %s32, 1
    %p36 = scmp.eq.s32.totalorder %s12, 1
    %p37 = scmp.ne.s32.totalorder %s32, %s34
    %p38 = scmp.eq.s32.totalorder %s12, 0
    %p39 = por %p37, %p38
    %p40 = scmp.ne.s32.totalorder %s32, %s34
    %p41 = scmp.eq.s32.totalorder %s17, 1
    %p42 = por %p40, %p41
    %p43 = scmp.ne.s32.totalorder %s34, %s35
    %p44 = scmp.eq.s32.totalorder %s17, 0
    %p45 = por %p43, %p44
    %p46 = scmp.ne.s32.totalorder %s34, %s35
    %p47 = scmp.eq.s32.totalorder %s18, 1
    %p48 = por %p46, %p47
    %p50 = scmp.ne.s32.totalorder %s35, %s49
    %p51 = scmp.eq.s32.totalorder %s18, 0
    %p52 = por %p50, %p51
    %s54 = sadd.s32 %s53, 1
    %p57 = scmp.eq.s32.totalorder %s12, 1
    %p58 = scmp.ne.s32.totalorder %s53, %s55
    %p59 = scmp.eq.s32.totalorder %s12, 0
    %p60 = por %p58, %p59
    %p61 = scmp.ne.s32.totalorder %s53, %s55
    %p62 = scmp.eq.s32.totalorder %s17, 1
    %p63 = por %p61, %p62
    %p64 = scmp.ne.s32.totalorder %s55, %s56
    %p65 = scmp.eq.s32.totalorder %s17, 0
    %p66 = por %p64, %p65
    %p67 = scmp.ne.s32.totalorder %s55, %s56
    %p68 = scmp.eq.s32.totalorder %s18, 1
    %p69 = por %p67, %p68
    %p71 = scmp.ne.s32.totalorder %s56, %s70
    %p72 = scmp.eq.s32.totalorder %s18, 0
    %p73 = por %p71, %p72
    %s75 = sadd.s32 %s74, 1
    %p78 = scmp.eq.s32.totalorder %s12, 1
    %p79 = scmp.ne.s32.totalorder %s74, %s76
    %p80 = scmp.eq.s32.totalorder %s12, 0
    %p81 = por %p79, %p80
    %p82 = scmp.ne.s32.totalorder %s74, %s76
    %p83 = scmp.eq.s32.totalorder %s17, 1
    %p84 = por %p82, %p83
    %p85 = scmp.ne.s32.totalorder %s76, %s77
    %p86 = scmp.eq.s32.totalorder %s17, 0
    %p87 = por %p85, %p86
    %p88 = scmp.ne.s32.totalorder %s76, %s77
    %p89 = scmp.eq.s32.totalorder %s18, 1
    %p90 = por %p88, %p89
    %p92 = scmp.ne.s32.totalorder %s77, %s91
    %p93 = scmp.eq.s32.totalorder %s18, 0
    %p94 = por %p92, %p93
    %s96 = sadd.s32 %s95, 1
    %p99 = scmp.eq.s32.totalorder %s12, 1
    %p100 = scmp.ne.s32.totalorder %s95, %s97
    %p101 = scmp.eq.s32.totalorder %s12, 0
    %p102 = por %p100, %p101
    %p103 = scmp.ne.s32.totalorder %s95, %s97
    %p104 = scmp.eq.s32.totalorder %s17, 1
    %p105 = por %p103, %p104
    %p106 = scmp.ne.s32.totalorder %s97, %s98
    %p107 = scmp.eq.s32.totalorder %s17, 0
    %p108 = por %p106, %p107
    %p109 = scmp.ne.s32.totalorder %s97, %s98
    %p110 = scmp.eq.s32.totalorder %s18, 1
    %p111 = por %p109, %p110
    %p113 = scmp.ne.s32.totalorder %s98, %s112
    %p114 = scmp.eq.s32.totalorder %s18, 0
    %p115 = por %p113, %p114
    %s117 = sadd.s32 %s116, 1
    %p120 = scmp.eq.s32.totalorder %s12, 1
    %p121 = scmp.ne.s32.totalorder %s116, %s118
    %p122 = scmp.eq.s32.totalorder %s12, 0
    %p123 = por %p121, %p122
    %p124 = scmp.ne.s32.totalorder %s116, %s118
    %p125 = scmp.eq.s32.totalorder %s17, 1
    %p126 = por %p124, %p125
    %p127 = scmp.ne.s32.totalorder %s118, %s119
    %p128 = scmp.eq.s32.totalorder %s17, 0
    %p129 = por %p127, %p128
    %p130 = scmp.ne.s32.totalorder %s118, %s119
    %p131 = scmp.eq.s32.totalorder %s18, 1
    %p132 = por %p130, %p131
    %p134 = scmp.ne.s32.totalorder %s119, %s133
    %p135 = scmp.eq.s32.totalorder %s18, 0
    %p136 = por %p134, %p135
    %s137 = ssub.s32 %s20, %s27
    %p138 = scmp.eq.s32.totalorder %s137, 0
    %s140 = sadd.s32 %s139, 1
    %s141 = scalar_select %p138, %s139, %s140
    %p144 = pneg %p138
    %p145 = scmp.eq.s32.totalorder %s12, 1
    %p146 = por %p144, %p145
    %p147 = scmp.ne.s32.totalorder %s139, %s142
    %p148 = scmp.eq.s32.totalorder %s12, 0
    %p149 = por %p147, %p148
    %p150 = scmp.ne.s32.totalorder %s139, %s142
    %p151 = scmp.eq.s32.totalorder %s17, 1
    %p152 = por %p150, %p151
    %p153 = scmp.ne.s32.totalorder %s142, %s143
    %p154 = scmp.eq.s32.totalorder %s17, 0
    %p155 = por %p153, %p154
    %p156 = scmp.ne.s32.totalorder %s142, %s143
    %p157 = scmp.eq.s32.totalorder %s18, 1
    %p158 = por %p156, %p157
    %p160 = scmp.ne.s32.totalorder %s143, %s159
    %p161 = scmp.eq.s32.totalorder %s18, 0
    %p162 = por %p160, %p161
    %s163 = ssub.s32 %s20, %s27
    %p164 = scmp.eq.s32.totalorder %s163, 0
    %s166 = sadd.s32 %s165, 1
    %s167 = scalar_select %p164, %s165, %s166
    %p170 = pneg %p164
    %p171 = scmp.eq.s32.totalorder %s12, 1
    %p172 = por %p170, %p171
    %p173 = scmp.ne.s32.totalorder %s165, %s168
    %p174 = scmp.eq.s32.totalorder %s12, 0
    %p175 = por %p173, %p174
    %p176 = scmp.ne.s32.totalorder %s165, %s168
    %p177 = scmp.eq.s32.totalorder %s17, 1
    %p178 = por %p176, %p177
    %p179 = scmp.ne.s32.totalorder %s168, %s169
    %p180 = scmp.eq.s32.totalorder %s17, 0
    %p181 = por %p179, %p180
    %p182 = scmp.ne.s32.totalorder %s168, %s169
    %p183 = scmp.eq.s32.totalorder %s18, 1
    %p184 = por %p182, %p183
    %p186 = scmp.ne.s32.totalorder %s169, %s185
    %p187 = scmp.eq.s32.totalorder %s18, 0
    %p188 = por %p186, %p187
    %p189 = scmp.le.s32.totalorder 1, %s12
    %p190 = scmp.lt.s32.totalorder %s12, 3
    %p191 = pnand %p189, %p190
    %p192 = pneg %p191
    // Predicated region
    $region9: #{gcn_forward.1} parent=5 // pred_check
      _
    $region10: #{gcn_forward.1} parent=5 // pred_check_branch
      %194 = sbr.rel (%p191) target = $region12
    $region11: #{gcn_forward.1} parent=5 // pred_region
      %s195 = ssub.s32 %s12, 1
      // Predicated region
      $region13: #{gcn_forward.1} parent=11 // pred_check
        %p196 = pneg %p45
      $region14: #{gcn_forward.1} parent=11 // pred_check_branch
        %198 = sbr.rel (%p196) target = $region16
      $region15: #{gcn_forward.1} parent=11 // pred_region
        _
      $region16: #{gcn_forward.1} parent=11 // pred_fallthru
        _
      // Predicated region
      $region17: #{gcn_forward.1} parent=11 // pred_check
        %p199 = pneg %p66
      $region18: #{gcn_forward.1} parent=11 // pred_check_branch
        %201 = sbr.rel (%p199) target = $region20
      $region19: #{gcn_forward.1} parent=11 // pred_region
        _
      $region20: #{gcn_forward.1} parent=11 // pred_fallthru
        _
      // Predicated region
      $region21: #{gcn_forward.1} parent=11 // pred_check
        %p202 = pneg %p87
      $region22: #{gcn_forward.1} parent=11 // pred_check_branch
        %204 = sbr.rel (%p202) target = $region24
      $region23: #{gcn_forward.1} parent=11 // pred_region
        _
      $region24: #{gcn_forward.1} parent=11 // pred_fallthru
        _
      // Predicated region
      $region25: #{gcn_forward.1} parent=11 // pred_check
        %p205 = pneg %p108
      $region26: #{gcn_forward.1} parent=11 // pred_check_branch
        %207 = sbr.rel (%p205) target = $region28
      $region27: #{gcn_forward.1} parent=11 // pred_region
        _
      $region28: #{gcn_forward.1} parent=11 // pred_fallthru
        _
      // Predicated region
      $region29: #{gcn_forward.1} parent=11 // pred_check
        %p208 = pneg %p129
      $region30: #{gcn_forward.1} parent=11 // pred_check_branch
        %210 = sbr.rel (%p208) target = $region32
      $region31: #{gcn_forward.1} parent=11 // pred_region
        _
      $region32: #{gcn_forward.1} parent=11 // pred_fallthru
        _
      // Predicated region
      $region33: #{gcn_forward.1} parent=11 // pred_check
        %p211 = pneg %p155
      $region34: #{gcn_forward.1} parent=11 // pred_check_branch
        %213 = sbr.rel (%p211) target = $region36
      $region35: #{gcn_forward.1} parent=11 // pred_region
        %s214 = smul.u32 16, %s22
        %p215 = scmp.lt.s32.totalorder %s214, 15
        %s216 = scalar_select %p215, %s214, 15
        %s217 = smul.addr %s216, 4
        %s218 = scalar_lea.vmem %s5, %s217
        %s219 = smul.u32 16, %s22
      $region36: #{gcn_forward.1} parent=11 // pred_fallthru
        _
    $region12: #{gcn_forward.1} parent=5 // pred_fallthru
      _
    %p220 = scmp.lt.s32.totalorder %s12, 2
    // Predicated region
    $region37: #{gcn_forward.1} parent=5 // pred_check
      %p221 = pneg %p220
    $region38: #{gcn_forward.1} parent=5 // pred_check_branch
      %223 = sbr.rel (%p221) target = $region40
    $region39: #{gcn_forward.1} parent=5 // pred_region
      _
    $region40: #{gcn_forward.1} parent=5 // pred_fallthru
      _
    %p224 = scmp.le.s32.totalorder 1, %s12
    %p225 = scmp.lt.s32.totalorder %s12, 3
    %p226 = pnand %p224, %p225
    %p227 = pneg %p226
    // Predicated region
    $region41: #{gcn_forward.1} parent=5 // pred_check
      _
    $region42: #{gcn_forward.1} parent=5 // pred_check_branch
      %229 = sbr.rel (%p226) target = $region44
    $region43: #{gcn_forward.1} parent=5 // pred_region
      %s230 = ssub.s32 %s12, 1
      %p231 = pneg %p45
      %p232 = pneg %p42
      %p233 = pneg %p66
      %p234 = pneg %p63
      %p235 = pneg %p87
      %p236 = pneg %p84
      %p237 = pneg %p108
      %p238 = pneg %p105
      %p239 = pneg %p129
      %p240 = pneg %p126
      %s241 = smul.u32 16, %s22
      %p242 = scmp.lt.s32.totalorder %s241, 15
      %s243 = scalar_select %p242, %s241, 15
      %s244 = smul.addr %s243, 4
      %s245 = scalar_lea.vmem %s5, %s244
      %p246 = pneg %p155
      %p247 = pneg %p152
      %p248 = pneg %p181
      %p249 = pneg %p178
      %s250 = smul.u32 16, %s22
      %p251 = scmp.lt.s32.totalorder %s250, 15
      %s252 = scalar_select %p251, %s250, 15
      %s253 = smul.addr %s252, 8
      %s254 = scalar_lea.vmem %s6, %s253
      %s255 = smul.u32 16, %s22
      %p256 = scmp.lt.s32.totalorder %s255, 15
      %s257 = scalar_select %p256, %s255, 15
      %s258 = smul.addr %s257, 4
      %s259 = scalar_lea.vmem %s5, %s258
      %s260 = smul.u32 16, %s22
      %s261 = smul.u32 16, %s22
      %p262 = scmp.lt.s32.totalorder %s261, 15
      %s263 = scalar_select %p262, %s261, 15
      %s264 = smul.addr %s263, 8
      %s265 = scalar_lea.vmem %s6, %s264
      %s266 = smul.u32 16, %s22
      %v268 = vld [vmem:[%s259] sm:$0xf]
      %v269 = vld [vmem:[%s259 + $0x4] sm:$0xf]
      %v270 = vld [vmem:[%s259 + $0x8] sm:$0xf]
      %v271 = vld [vmem:[%s259 + $0xc] sm:$0xf]
      %v272 = vld [vmem:[%s259 + $0x10] sm:$0xf]
      %v273 = vld [vmem:[%s259 + $0x14] sm:$0xf]
      %v274 = vld [vmem:[%s259 + $0x18] sm:$0xf]
      %v275 = vld [vmem:[%s259 + $0x1c] sm:$0xf]
      %v276 = vld [vmem:[%s259 + $0x20] sm:$0xf]
      %v277 = vld [vmem:[%s259 + $0x24] sm:$0xf]
      %v278 = vld [vmem:[%s259 + $0x28] sm:$0xf]
      %v279 = vld [vmem:[%s259 + $0x2c] sm:$0xf]
      %v280 = vld [vmem:[%s259 + $0x30] sm:$0xf]
      %v281 = vld [vmem:[%s259 + $0x34] sm:$0xf]
      %v282 = vld [vmem:[%s259 + $0x38] sm:$0xf]
      %v283 = vld [vmem:[%s259 + $0x3c] sm:$0xf]
      %p284 = scmp.eq.s32.totalorder %s21, 0
      // Predicated region
      $region45: #{gcn_forward.1} parent=43 // pred_check
        %p285 = pneg %p284
      $region46: #{gcn_forward.1} parent=43 // pred_check_branch
        %287 = sbr.rel (%p285) target = $region48
      $region47: #{gcn_forward.1} parent=43 // pred_region
        %v288 = vld [vmem:[%s0] sm:$0xf]
        %v289 = vld [vmem:[%s0 + $0x4] sm:$0xf]
        %v290 = vld [vmem:[%s0 + $0x8] sm:$0xf]
        %v291 = vld [vmem:[%s0 + $0xc] sm:$0xf]
        %v292 = vld [vmem:[%s0 + $0x10] sm:$0xf]
        %v293 = vld [vmem:[%s0 + $0x14] sm:$0xf]
        %v294 = vld [vmem:[%s0 + $0x18] sm:$0xf]
        %v295 = vld [vmem:[%s0 + $0x1c] sm:$0xf]
        %v296 = vld [vmem:[%s0 + $0x20] sm:$0xf]
        %v297 = vld [vmem:[%s0 + $0x24] sm:$0xf]
        %v298 = vld [vmem:[%s0 + $0x28] sm:$0xf]
        %v299 = vld [vmem:[%s0 + $0x2c] sm:$0xf]
        %v300 = vld [vmem:[%s0 + $0x30] sm:$0xf]
        %v301 = vld [vmem:[%s0 + $0x34] sm:$0xf]
        %v302 = vld [vmem:[%s0 + $0x38] sm:$0xf]
        %v303 = vld [vmem:[%s0 + $0x3c] sm:$0xf]
        %v320 = vunpack.c.l.b16 %v268
        %v321 = vunpack.c.l.b16 %v269
        %v322 = vunpack.c.l.b16 %v270
        %v323 = vunpack.c.l.b16 %v271
        %v324 = vunpack.c.l.b16 %v272
        %v325 = vunpack.c.l.b16 %v273
        %v326 = vunpack.c.l.b16 %v274
        %v327 = vunpack.c.l.b16 %v275
        %v328 = vunpack.c.l.b16 %v276
        %v329 = vunpack.c.l.b16 %v277
        %v330 = vunpack.c.l.b16 %v278
        %v331 = vunpack.c.l.b16 %v279
        %v332 = vunpack.c.l.b16 %v280
        %v333 = vunpack.c.l.b16 %v281
        %v334 = vunpack.c.l.b16 %v282
        %v335 = vunpack.c.l.b16 %v283
        %v336 = vpack.c.b16 %v321, %v320
        %v337 = vpack.c.b16 %v323, %v322
        %v338 = vpack.c.b16 %v325, %v324
        %v339 = vpack.c.b16 %v327, %v326
        %v340 = vpack.c.b16 %v329, %v328
        %v341 = vpack.c.b16 %v331, %v330
        %v342 = vpack.c.b16 %v333, %v332
        %v343 = vpack.c.b16 %v335, %v334
        %v368 = vunpack.c.l.b16 %v288
        %v369 = vunpack.c.l.b16 %v289
        %v370 = vunpack.c.l.b16 %v290
        %v371 = vunpack.c.l.b16 %v291
        %v372 = vunpack.c.l.b16 %v292
        %v373 = vunpack.c.l.b16 %v293
        %v374 = vunpack.c.l.b16 %v294
        %v375 = vunpack.c.l.b16 %v295
        %v376 = vunpack.c.l.b16 %v296
        %v377 = vunpack.c.l.b16 %v297
        %v378 = vunpack.c.l.b16 %v298
        %v379 = vunpack.c.l.b16 %v299
        %v380 = vunpack.c.l.b16 %v300
        %v381 = vunpack.c.l.b16 %v301
        %v382 = vunpack.c.l.b16 %v302
        %v383 = vunpack.c.l.b16 %v303
        %v384 = vpack.c.b16 %v369, %v368
        %v385 = vpack.c.b16 %v371, %v370
        %v386 = vpack.c.b16 %v373, %v372
        %v387 = vpack.c.b16 %v375, %v374
        %v388 = vpack.c.b16 %v377, %v376
        %v389 = vpack.c.b16 %v379, %v378
        %v390 = vpack.c.b16 %v381, %v380
        %v391 = vpack.c.b16 %v383, %v382
        %400 = vmatprep.subr.bf16.mxu0 0
        %401 = vmatpush1.bf16.msra.mxu0 %v384
        %402 = vmatprep.subr.bf16.mxu0 0
        %403 = vmatpush1.bf16.msra.mxu0 %v385
        %404 = vmatprep.subr.bf16.mxu0 0
        %405 = vmatpush1.bf16.msra.mxu0 %v386
        %406 = vmatprep.subr.bf16.mxu0 0
        %407 = vmatpush1.bf16.msra.mxu0 %v387
        %408 = vmatprep.subr.bf16.mxu0 0
        %409 = vmatpush1.bf16.msra.mxu0 %v388
        %410 = vmatprep.subr.bf16.mxu0 0
        %411 = vmatpush1.bf16.msra.mxu0 %v389
        %412 = vmatprep.subr.bf16.mxu0 0
        %413 = vmatpush1.bf16.msra.mxu0 %v390
        %414 = vmatprep.subr.bf16.mxu0 0
        %415 = vmatpush1.bf16.msra.mxu0 %v391
        %416 = vmatprep.subr.bf16.mxu0 0
        %417 = vmatpush1.bf16.msra.mxu0 0
        %418 = vmatprep.subr.bf16.mxu0 0
        %419 = vmatpush1.bf16.msra.mxu0 0
        %420 = vmatprep.subr.bf16.mxu0 0
        %421 = vmatpush1.bf16.msra.mxu0 0
        %422 = vmatprep.subr.bf16.mxu0 0
        %423 = vmatpush1.bf16.msra.mxu0 0
        %424 = vmatprep.subr.bf16.mxu0 0
        %425 = vmatpush1.bf16.msra.mxu0 0
        %426 = vmatprep.subr.bf16.mxu0 0
        %427 = vmatpush1.bf16.msra.mxu0 0
        %428 = vmatprep.subr.bf16.mxu0 0
        %429 = vmatpush1.bf16.msra.mxu0 0
        %430 = vmatprep.subr.bf16.mxu0 0
        %431 = vmatpush1.bf16.msra.mxu0 0
        %432 = vmatprep.mubr.bf16.mxu0 0
        %433 = vmatmul.mubr.bf16.gmra.mrb[0].mxu0 %v336
        %v434 = vpop.f32.mrb[0].mxu0
        %v435 = vadd.f32 0.0, %v434
        %v436 = vpop.f32.mrb[0].mxu0
        %v437 = vpop.f32.mrb[0].mxu0
        %v438 = vadd.f32 0.0, %v437
        %v439 = vpop.f32.mrb[0].mxu0
        %440 = vmatprep.mubr.bf16.mxu0 0
        %441 = vmatmul.mubr.bf16.gmra.mrb[0].mxu0 %v337
        %v442 = vpop.f32.mrb[0].mxu0
        %v443 = vadd.f32 0.0, %v442
        %v444 = vpop.f32.mrb[0].mxu0
        %v445 = vpop.f32.mrb[0].mxu0
        %v446 = vadd.f32 0.0, %v445
        %v447 = vpop.f32.mrb[0].mxu0
        %448 = vmatprep.mubr.bf16.mxu0 0
        %449 = vmatmul.mubr.bf16.gmra.mrb[0].mxu0 %v338
        %v450 = vpop.f32.mrb[0].mxu0
        %v451 = vadd.f32 0.0, %v450
        %v452 = vpop.f32.mrb[0].mxu0
        %v453 = vpop.f32.mrb[0].mxu0
        %v454 = vadd.f32 0.0, %v453
        %v455 = vpop.f32.mrb[0].mxu0
        %456 = vmatprep.mubr.bf16.mxu0 0
        %457 = vmatmul.mubr.bf16.gmra.mrb[0].mxu0 %v339
        %v458 = vpop.f32.mrb[0].mxu0
        %v459 = vadd.f32 0.0, %v458
        %v460 = vpop.f32.mrb[0].mxu0
        %v461 = vpop.f32.mrb[0].mxu0
        %v462 = vadd.f32 0.0, %v461
        %v463 = vpop.f32.mrb[0].mxu0
        %464 = vmatprep.mubr.bf16.mxu0 0
        %465 = vmatmul.mubr.bf16.gmra.mrb[0].mxu0 %v340
        %v466 = vpop.f32.mrb[0].mxu0
        %v467 = vadd.f32 0.0, %v466
        %v468 = vpop.f32.mrb[0].mxu0
        %v469 = vpop.f32.mrb[0].mxu0
        %v470 = vadd.f32 0.0, %v469
        %v471 = vpop.f32.mrb[0].mxu0
        %472 = vmatprep.mubr.bf16.mxu0 0
        %473 = vmatmul.mubr.bf16.gmra.mrb[0].mxu0 %v341
        %v474 = vpop.f32.mrb[0].mxu0
        %v475 = vadd.f32 0.0, %v474
        %v476 = vpop.f32.mrb[0].mxu0
        %v477 = vpop.f32.mrb[0].mxu0
        %v478 = vadd.f32 0.0, %v477
        %v479 = vpop.f32.mrb[0].mxu0
        %480 = vmatprep.mubr.bf16.mxu0 0
        %481 = vmatmul.mubr.bf16.gmra.mrb[0].mxu0 %v342
        %v482 = vpop.f32.mrb[0].mxu0
        %v483 = vadd.f32 0.0, %v482
        %v484 = vpop.f32.mrb[0].mxu0
        %v485 = vpop.f32.mrb[0].mxu0
        %v486 = vadd.f32 0.0, %v485
        %v487 = vpop.f32.mrb[0].mxu0
        %488 = vmatprep.mubr.bf16.mxu0 0
        %489 = vmatmul.mubr.bf16.gmra.mrb[0].mxu0 %v343
        %v490 = vpop.f32.mrb[0].mxu0
        %v491 = vadd.f32 0.0, %v490
        %v492 = vpop.f32.mrb[0].mxu0
        %v493 = vpop.f32.mrb[0].mxu0
        %v494 = vadd.f32 0.0, %v493
        %v495 = vpop.f32.mrb[0].mxu0
        %496 = vdwg.mxu0
        %v497 = vpack.c.bf16 %v438, %v435
        %v498 = vpack.c.bf16 %v446, %v443
        %v499 = vpack.c.bf16 %v454, %v451
        %v500 = vpack.c.bf16 %v462, %v459
        %v501 = vpack.c.bf16 %v470, %v467
        %v502 = vpack.c.bf16 %v478, %v475
        %v503 = vpack.c.bf16 %v486, %v483
        %v504 = vpack.c.bf16 %v494, %v491
        %v505 = vld [vmem:[%s1] sm:$0xf]
        %v506 = vld [vmem:[%s1 + $0x4] sm:$0xf]
        %v507 = vld [vmem:[%s1 + $0x8] sm:$0xf]
        %v508 = vld [vmem:[%s1 + $0xc] sm:$0xf]
        %v509 = vld [vmem:[%s1 + $0x10] sm:$0xf]
        %v510 = vld [vmem:[%s1 + $0x14] sm:$0xf]
        %v511 = vld [vmem:[%s1 + $0x18] sm:$0xf]
        %v512 = vld [vmem:[%s1 + $0x1c] sm:$0xf]
        %v513 = vld [vmem:[%s1 + $0x20] sm:$0xf]
        %v514 = vld [vmem:[%s1 + $0x24] sm:$0xf]
        %v515 = vld [vmem:[%s1 + $0x28] sm:$0xf]
        %v516 = vld [vmem:[%s1 + $0x2c] sm:$0xf]
        %v517 = vld [vmem:[%s1 + $0x30] sm:$0xf]
        %v518 = vld [vmem:[%s1 + $0x34] sm:$0xf]
        %v519 = vld [vmem:[%s1 + $0x38] sm:$0xf]
        %v520 = vld [vmem:[%s1 + $0x3c] sm:$0xf]
        %v521 = vld [vmem:[%s2] sm:$0x1]
        %v523 = vlaneseq
        %v524 = vshrl.u32 %v523, 7
        %v525 = vsub.s32 0, %v524
        %v526 = vrot.slane %v521, %v525
        %v544 = vunpack.c.l.b16 %v505
        %v545 = vunpack.c.l.b16 %v506
        %v546 = vunpack.c.l.b16 %v507
        %v547 = vunpack.c.l.b16 %v508
        %v548 = vunpack.c.l.b16 %v509
        %v549 = vunpack.c.l.b16 %v510
        %v550 = vunpack.c.l.b16 %v511
        %v551 = vunpack.c.l.b16 %v512
        %v552 = vunpack.c.l.b16 %v513
        %v553 = vunpack.c.l.b16 %v514
        %v554 = vunpack.c.l.b16 %v515
        %v555 = vunpack.c.l.b16 %v516
        %v556 = vunpack.c.l.b16 %v517
        %v557 = vunpack.c.l.b16 %v518
        %v558 = vunpack.c.l.b16 %v519
        %v559 = vunpack.c.l.b16 %v520
        %v560 = vpack.c.b16 %v545, %v544
        %v561 = vpack.c.b16 %v547, %v546
        %v562 = vpack.c.b16 %v549, %v548
        %v563 = vpack.c.b16 %v551, %v550
        %v564 = vpack.c.b16 %v553, %v552
        %v565 = vpack.c.b16 %v555, %v554
        %v566 = vpack.c.b16 %v557, %v556
        %v567 = vpack.c.b16 %v559, %v558
        %576 = vmatprep.subr.bf16.mxu0 0
        %577 = vmatpush1.bf16.msra.mxu0 %v560
        %578 = vmatprep.subr.bf16.mxu0 0
        %579 = vmatpush1.bf16.msra.mxu0 %v561
        %580 = vmatprep.subr.bf16.mxu0 0
        %581 = vmatpush1.bf16.msra.mxu0 %v562
        %582 = vmatprep.subr.bf16.mxu0 0
        %583 = vmatpush1.bf16.msra.mxu0 %v563
        %584 = vmatprep.subr.bf16.mxu0 0
        %585 = vmatpush1.bf16.msra.mxu0 %v564
        %586 = vmatprep.subr.bf16.mxu0 0
        %587 = vmatpush1.bf16.msra.mxu0 %v565
        %588 = vmatprep.subr.bf16.mxu0 0
        %589 = vmatpush1.bf16.msra.mxu0 %v566
        %590 = vmatprep.subr.bf16.mxu0 0
        %591 = vmatpush1.bf16.msra.mxu0 %v567
        %592 = vmatprep.subr.bf16.mxu0 0
        %593 = vmatpush1.bf16.msra.mxu0 0
        %594 = vmatprep.subr.bf16.mxu0 0
        %595 = vmatpush1.bf16.msra.mxu0 0
        %596 = vmatprep.subr.bf16.mxu0 0
        %597 = vmatpush1.bf16.msra.mxu0 0
        %598 = vmatprep.subr.bf16.mxu0 0
        %599 = vmatpush1.bf16.msra.mxu0 0
        %600 = vmatprep.subr.bf16.mxu0 0
        %601 = vmatpush1.bf16.msra.mxu0 0
        %602 = vmatprep.subr.bf16.mxu0 0
        %603 = vmatpush1.bf16.msra.mxu0 0
        %604 = vmatprep.subr.bf16.mxu0 0
        %605 = vmatpush1.bf16.msra.mxu0 0
        %606 = vmatprep.subr.bf16.mxu0 0
        %607 = vmatpush1.bf16.msra.mxu0 0
        %608 = vmatprep.mubr.bf16.mxu0 0
        %609 = vmatmul.mubr.bf16.gmra.mrb[0].mxu0 %v497
        %v610 = vpop.f32.mrb[0].mxu0
        %v611 = vadd.f32 %v526, %v610
        %v612 = vpop.f32.mrb[0].mxu0
        %v613 = vpop.f32.mrb[0].mxu0
        %v614 = vadd.f32 %v526, %v613
        %v615 = vpop.f32.mrb[0].mxu0
        %616 = vmatprep.mubr.bf16.mxu0 0
        %617 = vmatmul.mubr.bf16.gmra.mrb[0].mxu0 %v498
        %v618 = vpop.f32.mrb[0].mxu0
        %v619 = vadd.f32 %v526, %v618
        %v620 = vpop.f32.mrb[0].mxu0
        %v621 = vpop.f32.mrb[0].mxu0
        %v622 = vadd.f32 %v526, %v621
        %v623 = vpop.f32.mrb[0].mxu0
        %624 = vmatprep.mubr.bf16.mxu0 0
        %625 = vmatmul.mubr.bf16.gmra.mrb[0].mxu0 %v499
        %v626 = vpop.f32.mrb[0].mxu0
        %v627 = vadd.f32 %v526, %v626
        %v628 = vpop.f32.mrb[0].mxu0
        %v629 = vpop.f32.mrb[0].mxu0
        %v630 = vadd.f32 %v526, %v629
        %v631 = vpop.f32.mrb[0].mxu0
        %632 = vmatprep.mubr.bf16.mxu0 0
        %633 = vmatmul.mubr.bf16.gmra.mrb[0].mxu0 %v500
        %v634 = vpop.f32.mrb[0].mxu0
        %v635 = vadd.f32 %v526, %v634
        %v636 = vpop.f32.mrb[0].mxu0
        %v637 = vpop.f32.mrb[0].mxu0
        %v638 = vadd.f32 %v526, %v637
        %v639 = vpop.f32.mrb[0].mxu0
        %640 = vmatprep.mubr.bf16.mxu0 0
        %641 = vmatmul.mubr.bf16.gmra.mrb[0].mxu0 %v501
        %v642 = vpop.f32.mrb[0].mxu0
        %v643 = vadd.f32 %v526, %v642
        %v644 = vpop.f32.mrb[0].mxu0
        %v645 = vpop.f32.mrb[0].mxu0
        %v646 = vadd.f32 %v526, %v645
        %v647 = vpop.f32.mrb[0].mxu0
        %648 = vmatprep.mubr.bf16.mxu0 0
        %649 = vmatmul.mubr.bf16.gmra.mrb[0].mxu0 %v502
        %v650 = vpop.f32.mrb[0].mxu0
        %v651 = vadd.f32 %v526, %v650
        %v652 = vpop.f32.mrb[0].mxu0
        %v653 = vpop.f32.mrb[0].mxu0
        %v654 = vadd.f32 %v526, %v653
        %v655 = vpop.f32.mrb[0].mxu0
        %656 = vmatprep.mubr.bf16.mxu0 0
        %657 = vmatmul.mubr.bf16.gmra.mrb[0].mxu0 %v503
        %v658 = vpop.f32.mrb[0].mxu0
        %v659 = vadd.f32 %v526, %v658
        %v660 = vpop.f32.mrb[0].mxu0
        %v661 = vpop.f32.mrb[0].mxu0
        %v662 = vadd.f32 %v526, %v661
        %v663 = vpop.f32.mrb[0].mxu0
        %664 = vmatprep.mubr.bf16.mxu0 0
        %665 = vmatmul.mubr.bf16.gmra.mrb[0].mxu0 %v504
        %v666 = vpop.f32.mrb[0].mxu0
        %v667 = vadd.f32 %v526, %v666
        %v668 = vpop.f32.mrb[0].mxu0
        %v669 = vpop.f32.mrb[0].mxu0
        %v670 = vadd.f32 %v526, %v669
        %v671 = vpop.f32.mrb[0].mxu0
        %672 = vdwg.mxu0
        %v673 = vmax.f32 %v611, 0.0
        %v674 = vmax.f32 %v614, 0.0
        %v675 = vmax.f32 %v619, 0.0
        %v676 = vmax.f32 %v622, 0.0
        %v677 = vmax.f32 %v627, 0.0
        %v678 = vmax.f32 %v630, 0.0
        %v679 = vmax.f32 %v635, 0.0
        %v680 = vmax.f32 %v638, 0.0
        %v681 = vmax.f32 %v643, 0.0
        %v682 = vmax.f32 %v646, 0.0
        %v683 = vmax.f32 %v651, 0.0
        %v684 = vmax.f32 %v654, 0.0
        %v685 = vmax.f32 %v659, 0.0
        %v686 = vmax.f32 %v662, 0.0
        %v687 = vmax.f32 %v667, 0.0
        %v688 = vmax.f32 %v670, 0.0
        %v689 = vpack.c.bf16 %v674, %v673
        %v690 = vpack.c.bf16 %v676, %v675
        %v691 = vpack.c.bf16 %v678, %v677
        %v692 = vpack.c.bf16 %v680, %v679
        %v693 = vpack.c.bf16 %v682, %v681
        %v694 = vpack.c.bf16 %v684, %v683
        %v695 = vpack.c.bf16 %v686, %v685
        %v696 = vpack.c.bf16 %v688, %v687
        %v697 = vld [vmem:[%s3] sm:$0xf]
        %v698 = vld [vmem:[%s3 + $0x4] sm:$0xf]
        %v699 = vld [vmem:[%s3 + $0x8] sm:$0xf]
        %v700 = vld [vmem:[%s3 + $0xc] sm:$0xf]
        %v701 = vld [vmem:[%s3 + $0x10] sm:$0xf]
        %v702 = vld [vmem:[%s3 + $0x14] sm:$0xf]
        %v703 = vld [vmem:[%s3 + $0x18] sm:$0xf]
        %v704 = vld [vmem:[%s3 + $0x1c] sm:$0xf]
        %v705 = vld [vmem:[%s3 + $0x20] sm:$0xf]
        %v706 = vld [vmem:[%s3 + $0x24] sm:$0xf]
        %v707 = vld [vmem:[%s3 + $0x28] sm:$0xf]
        %v708 = vld [vmem:[%s3 + $0x2c] sm:$0xf]
        %v709 = vld [vmem:[%s3 + $0x30] sm:$0xf]
        %v710 = vld [vmem:[%s3 + $0x34] sm:$0xf]
        %v711 = vld [vmem:[%s3 + $0x38] sm:$0xf]
        %v712 = vld [vmem:[%s3 + $0x3c] sm:$0xf]
        %v729 = vunpack.c.l.b16 %v697
        %v730 = vunpack.c.l.b16 %v698
        %v731 = vunpack.c.l.b16 %v699
        %v732 = vunpack.c.l.b16 %v700
        %v733 = vunpack.c.l.b16 %v701
        %v734 = vunpack.c.l.b16 %v702
        %v735 = vunpack.c.l.b16 %v703
        %v736 = vunpack.c.l.b16 %v704
        %v737 = vunpack.c.l.b16 %v705
        %v738 = vunpack.c.l.b16 %v706
        %v739 = vunpack.c.l.b16 %v707
        %v740 = vunpack.c.l.b16 %v708
        %v741 = vunpack.c.l.b16 %v709
        %v742 = vunpack.c.l.b16 %v710
        %v743 = vunpack.c.l.b16 %v711
        %v744 = vunpack.c.l.b16 %v712
        %v745 = vpack.c.b16 %v730, %v729
        %v746 = vpack.c.b16 %v732, %v731
        %v747 = vpack.c.b16 %v734, %v733
        %v748 = vpack.c.b16 %v736, %v735
        %v749 = vpack.c.b16 %v738, %v737
        %v750 = vpack.c.b16 %v740, %v739
        %v751 = vpack.c.b16 %v742, %v741
        %v752 = vpack.c.b16 %v744, %v743
        %761 = vmatprep.subr.bf16.mxu0 0
        %762 = vmatpush1.bf16.msra.mxu0 %v745
        %763 = vmatprep.subr.bf16.mxu0 0
        %764 = vmatpush1.bf16.msra.mxu0 %v746
        %765 = vmatprep.subr.bf16.mxu0 0
        %766 = vmatpush1.bf16.msra.mxu0 %v747
        %767 = vmatprep.subr.bf16.mxu0 0
        %768 = vmatpush1.bf16.msra.mxu0 %v748
        %769 = vmatprep.subr.bf16.mxu0 0
        %770 = vmatpush1.bf16.msra.mxu0 %v749
        %771 = vmatprep.subr.bf16.mxu0 0
        %772 = vmatpush1.bf16.msra.mxu0 %v750
        %773 = vmatprep.subr.bf16.mxu0 0
        %774 = vmatpush1.bf16.msra.mxu0 %v751
        %775 = vmatprep.subr.bf16.mxu0 0
        %776 = vmatpush1.bf16.msra.mxu0 %v752
        %777 = vmatprep.subr.bf16.mxu0 0
        %778 = vmatpush1.bf16.msra.mxu0 0
        %779 = vmatprep.subr.bf16.mxu0 0
        %780 = vmatpush1.bf16.msra.mxu0 0
        %781 = vmatprep.subr.bf16.mxu0 0
        %782 = vmatpush1.bf16.msra.mxu0 0
        %783 = vmatprep.subr.bf16.mxu0 0
        %784 = vmatpush1.bf16.msra.mxu0 0
        %785 = vmatprep.subr.bf16.mxu0 0
        %786 = vmatpush1.bf16.msra.mxu0 0
        %787 = vmatprep.subr.bf16.mxu0 0
        %788 = vmatpush1.bf16.msra.mxu0 0
        %789 = vmatprep.subr.bf16.mxu0 0
        %790 = vmatpush1.bf16.msra.mxu0 0
        %791 = vmatprep.subr.bf16.mxu0 0
        %792 = vmatpush1.bf16.msra.mxu0 0
        %793 = vmatprep.mubr.bf16.mxu0 0
        %794 = vmatmul.mubr.bf16.gmra.mrb[0].mxu0 %v689
        %v795 = vpop.f32.mrb[0].mxu0
        %v796 = vadd.f32 0.0, %v795
        %v797 = vpop.f32.mrb[0].mxu0
        %v798 = vpop.f32.mrb[0].mxu0
        %v799 = vadd.f32 0.0, %v798
        %v800 = vpop.f32.mrb[0].mxu0
        %801 = vmatprep.mubr.bf16.mxu0 0
        %802 = vmatmul.mubr.bf16.gmra.mrb[0].mxu0 %v690
        %v803 = vpop.f32.mrb[0].mxu0
        %v804 = vadd.f32 0.0, %v803
        %v805 = vpop.f32.mrb[0].mxu0
        %v806 = vpop.f32.mrb[0].mxu0
        %v807 = vadd.f32 0.0, %v806
        %v808 = vpop.f32.mrb[0].mxu0
        %809 = vmatprep.mubr.bf16.mxu0 0
        %810 = vmatmul.mubr.bf16.gmra.mrb[0].mxu0 %v691
        %v811 = vpop.f32.mrb[0].mxu0
        %v812 = vadd.f32 0.0, %v811
        %v813 = vpop.f32.mrb[0].mxu0
        %v814 = vpop.f32.mrb[0].mxu0
        %v815 = vadd.f32 0.0, %v814
        %v816 = vpop.f32.mrb[0].mxu0
        %817 = vmatprep.mubr.bf16.mxu0 0
        %818 = vmatmul.mubr.bf16.gmra.mrb[0].mxu0 %v692
        %v819 = vpop.f32.mrb[0].mxu0
        %v820 = vadd.f32 0.0, %v819
        %v821 = vpop.f32.mrb[0].mxu0
        %v822 = vpop.f32.mrb[0].mxu0
        %v823 = vadd.f32 0.0, %v822
        %v824 = vpop.f32.mrb[0].mxu0
        %825 = vmatprep.mubr.bf16.mxu0 0
        %826 = vmatmul.mubr.bf16.gmra.mrb[0].mxu0 %v693
        %v827 = vpop.f32.mrb[0].mxu0
        %v828 = vadd.f32 0.0, %v827
        %v829 = vpop.f32.mrb[0].mxu0
        %v830 = vpop.f32.mrb[0].mxu0
        %v831 = vadd.f32 0.0, %v830
        %v832 = vpop.f32.mrb[0].mxu0
        %833 = vmatprep.mubr.bf16.mxu0 0
        %834 = vmatmul.mubr.bf16.gmra.mrb[0].mxu0 %v694
        %v835 = vpop.f32.mrb[0].mxu0
        %v836 = vadd.f32 0.0, %v835
        %v837 = vpop.f32.mrb[0].mxu0
        %v838 = vpop.f32.mrb[0].mxu0
        %v839 = vadd.f32 0.0, %v838
        %v840 = vpop.f32.mrb[0].mxu0
        %841 = vmatprep.mubr.bf16.mxu0 0
        %842 = vmatmul.mubr.bf16.gmra.mrb[0].mxu0 %v695
        %v843 = vpop.f32.mrb[0].mxu0
        %v844 = vadd.f32 0.0, %v843
        %v845 = vpop.f32.mrb[0].mxu0
        %v846 = vpop.f32.mrb[0].mxu0
        %v847 = vadd.f32 0.0, %v846
        %v848 = vpop.f32.mrb[0].mxu0
        %849 = vmatprep.mubr.bf16.mxu0 0
        %850 = vmatmul.mubr.bf16.gmra.mrb[0].mxu0 %v696
        %v851 = vpop.f32.mrb[0].mxu0
        %v852 = vadd.f32 0.0, %v851
        %v853 = vpop.f32.mrb[0].mxu0
        %v854 = vpop.f32.mrb[0].mxu0
        %v855 = vadd.f32 0.0, %v854
        %v856 = vpop.f32.mrb[0].mxu0
        %857 = vdwg.mxu0
        %s858 = smul.u32 %s22, 128
        %v859 = vpack.c.bf16 %v799, %v796
        %v860 = vpack.c.bf16 %v807, %v804
        %v861 = vpack.c.bf16 %v815, %v812
        %v862 = vpack.c.bf16 %v823, %v820
        %v863 = vpack.c.bf16 %v831, %v828
        %v864 = vpack.c.bf16 %v839, %v836
        %v865 = vpack.c.bf16 %v847, %v844
        %v866 = vpack.c.bf16 %v855, %v852
        %s867 = sshra.s32 %s858, 4
        %s868 = sand.u32 %s858, 15
        %s869 = smul.addr %s867, 8
        %s870 = scalar_lea.vmem [#allocation2], %s869
        %871 = vst [vmem:[%s870] sm:$0xff] %v859
        %872 = vst [vmem:[%s870 + $0x8] sm:$0xff] %v860
        %873 = vst [vmem:[%s870 + $0x10] sm:$0xff] %v861
        %874 = vst [vmem:[%s870 + $0x18] sm:$0xff] %v862
        %875 = vst [vmem:[%s870 + $0x20] sm:$0xff] %v863
        %876 = vst [vmem:[%s870 + $0x28] sm:$0xff] %v864
        %877 = vst [vmem:[%s870 + $0x30] sm:$0xff] %v865
        %878 = vst [vmem:[%s870 + $0x38] sm:$0xff] %v866
        %879 = vst [vmem:[%s265] sm:$0xff] 0.0
        %880 = vst [vmem:[%s265 + $0x8] sm:$0xff] 0.0
        %881 = vst [vmem:[%s265 + $0x10] sm:$0xff] 0.0
        %882 = vst [vmem:[%s265 + $0x18] sm:$0xff] 0.0
        %883 = vst [vmem:[%s265 + $0x20] sm:$0xff] 0.0
        %884 = vst [vmem:[%s265 + $0x28] sm:$0xff] 0.0
        %885 = vst [vmem:[%s265 + $0x30] sm:$0xff] 0.0
        %886 = vst [vmem:[%s265 + $0x38] sm:$0xff] 0.0
        %887 = vst [vmem:[%s265 + $0x40] sm:$0xff] 0.0
        %888 = vst [vmem:[%s265 + $0x48] sm:$0xff] 0.0
        %889 = vst [vmem:[%s265 + $0x50] sm:$0xff] 0.0
        %890 = vst [vmem:[%s265 + $0x58] sm:$0xff] 0.0
        %891 = vst [vmem:[%s265 + $0x60] sm:$0xff] 0.0
        %892 = vst [vmem:[%s265 + $0x68] sm:$0xff] 0.0
        %893 = vst [vmem:[%s265 + $0x70] sm:$0xff] 0.0
        %894 = vst [vmem:[%s265 + $0x78] sm:$0xff] 0.0
      $region48: #{gcn_forward.1} parent=43 // pred_fallthru
        _
      %p895 = scmp.eq.s32.totalorder %s21, 1
      // Predicated region
      $region49: #{gcn_forward.1} parent=43 // pred_check
        %p896 = pneg %p895
      $region50: #{gcn_forward.1} parent=43 // pred_check_branch
        %898 = sbr.rel (%p896) target = $region52
      $region51: #{gcn_forward.1} parent=43 // pred_region
        %v899 = vld [vmem:[#allocation2] sm:$0xff]
        %v900 = vld [vmem:[#allocation2 + $0x8] sm:$0xff]
        %v901 = vld [vmem:[#allocation2 + $0x10] sm:$0xff]
        %v902 = vld [vmem:[#allocation2 + $0x18] sm:$0xff]
        %v903 = vld [vmem:[#allocation2 + $0x20] sm:$0xff]
        %v904 = vld [vmem:[#allocation2 + $0x28] sm:$0xff]
        %v905 = vld [vmem:[#allocation2 + $0x30] sm:$0xff]
        %v906 = vld [vmem:[#allocation2 + $0x38] sm:$0xff]
        %v907 = vld [vmem:[%s4] sm:$0x1]
        %v909 = vlaneseq
        %v910 = vshrl.u32 %v909, 7
        %v911 = vsub.s32 0, %v910
        %v912 = vrot.slane %v907, %v911
        %v930 = vunpack.c.l.b16 %v268
        %v931 = vunpack.c.l.b16 %v269
        %v932 = vunpack.c.l.b16 %v270
        %v933 = vunpack.c.l.b16 %v271
        %v934 = vunpack.c.l.b16 %v272
        %v935 = vunpack.c.l.b16 %v273
        %v936 = vunpack.c.l.b16 %v274
        %v937 = vunpack.c.l.b16 %v275
        %v938 = vunpack.c.l.b16 %v276
        %v939 = vunpack.c.l.b16 %v277
        %v940 = vunpack.c.l.b16 %v278
        %v941 = vunpack.c.l.b16 %v279
        %v942 = vunpack.c.l.b16 %v280
        %v943 = vunpack.c.l.b16 %v281
        %v944 = vunpack.c.l.b16 %v282
        %v945 = vunpack.c.l.b16 %v283
        %v946 = vpack.c.b16 %v931, %v930
        %v947 = vpack.c.b16 %v933, %v932
        %v948 = vpack.c.b16 %v935, %v934
        %v949 = vpack.c.b16 %v937, %v936
        %v950 = vpack.c.b16 %v939, %v938
        %v951 = vpack.c.b16 %v941, %v940
        %v952 = vpack.c.b16 %v943, %v942
        %v953 = vpack.c.b16 %v945, %v944
        %962 = vmatprep.subr.bf16.mxu0 0
        %963 = vmatpush1.bf16.msra.mxu0 %v899
        %964 = vmatprep.subr.bf16.mxu0 0
        %965 = vmatpush1.bf16.msra.mxu0 %v900
        %966 = vmatprep.subr.bf16.mxu0 0
        %967 = vmatpush1.bf16.msra.mxu0 %v901
        %968 = vmatprep.subr.bf16.mxu0 0
        %969 = vmatpush1.bf16.msra.mxu0 %v902
        %970 = vmatprep.subr.bf16.mxu0 0
        %971 = vmatpush1.bf16.msra.mxu0 %v903
        %972 = vmatprep.subr.bf16.mxu0 0
        %973 = vmatpush1.bf16.msra.mxu0 %v904
        %974 = vmatprep.subr.bf16.mxu0 0
        %975 = vmatpush1.bf16.msra.mxu0 %v905
        %976 = vmatprep.subr.bf16.mxu0 0
        %977 = vmatpush1.bf16.msra.mxu0 %v906
        %978 = vmatprep.subr.bf16.mxu0 0
        %979 = vmatpush1.bf16.msra.mxu0 0
        %980 = vmatprep.subr.bf16.mxu0 0
        %981 = vmatpush1.bf16.msra.mxu0 0
        %982 = vmatprep.subr.bf16.mxu0 0
        %983 = vmatpush1.bf16.msra.mxu0 0
        %984 = vmatprep.subr.bf16.mxu0 0
        %985 = vmatpush1.bf16.msra.mxu0 0
        %986 = vmatprep.subr.bf16.mxu0 0
        %987 = vmatpush1.bf16.msra.mxu0 0
        %988 = vmatprep.subr.bf16.mxu0 0
        %989 = vmatpush1.bf16.msra.mxu0 0
        %990 = vmatprep.subr.bf16.mxu0 0
        %991 = vmatpush1.bf16.msra.mxu0 0
        %992 = vmatprep.subr.bf16.mxu0 0
        %993 = vmatpush1.bf16.msra.mxu0 0
        %994 = vmatprep.mubr.bf16.mxu0 0
        %995 = vmatmul.mubr.bf16.gmra.mrb[0].mxu0 %v946
        %v996 = vpop.f32.mrb[0].mxu0
        %v997 = vadd.f32 %v912, %v996
        %v998 = vpop.f32.mrb[0].mxu0
        %v999 = vpop.f32.mrb[0].mxu0
        %v1000 = vadd.f32 %v912, %v999
        %v1001 = vpop.f32.mrb[0].mxu0
        %1002 = vmatprep.mubr.bf16.mxu0 0
        %1003 = vmatmul.mubr.bf16.gmra.mrb[0].mxu0 %v947
        %v1004 = vpop.f32.mrb[0].mxu0
        %v1005 = vadd.f32 %v912, %v1004
        %v1006 = vpop.f32.mrb[0].mxu0
        %v1007 = vpop.f32.mrb[0].mxu0
        %v1008 = vadd.f32 %v912, %v1007
        %v1009 = vpop.f32.mrb[0].mxu0
        %1010 = vmatprep.mubr.bf16.mxu0 0
        %1011 = vmatmul.mubr.bf16.gmra.mrb[0].mxu0 %v948
        %v1012 = vpop.f32.mrb[0].mxu0
        %v1013 = vadd.f32 %v912, %v1012
        %v1014 = vpop.f32.mrb[0].mxu0
        %v1015 = vpop.f32.mrb[0].mxu0
        %v1016 = vadd.f32 %v912, %v1015
        %v1017 = vpop.f32.mrb[0].mxu0
        %1018 = vmatprep.mubr.bf16.mxu0 0
        %1019 = vmatmul.mubr.bf16.gmra.mrb[0].mxu0 %v949
        %v1020 = vpop.f32.mrb[0].mxu0
        %v1021 = vadd.f32 %v912, %v1020
        %v1022 = vpop.f32.mrb[0].mxu0
        %v1023 = vpop.f32.mrb[0].mxu0
        %v1024 = vadd.f32 %v912, %v1023
        %v1025 = vpop.f32.mrb[0].mxu0
        %1026 = vmatprep.mubr.bf16.mxu0 0
        %1027 = vmatmul.mubr.bf16.gmra.mrb[0].mxu0 %v950
        %v1028 = vpop.f32.mrb[0].mxu0
        %v1029 = vadd.f32 %v912, %v1028
        %v1030 = vpop.f32.mrb[0].mxu0
        %v1031 = vpop.f32.mrb[0].mxu0
        %v1032 = vadd.f32 %v912, %v1031
        %v1033 = vpop.f32.mrb[0].mxu0
        %1034 = vmatprep.mubr.bf16.mxu0 0
        %1035 = vmatmul.mubr.bf16.gmra.mrb[0].mxu0 %v951
        %v1036 = vpop.f32.mrb[0].mxu0
        %v1037 = vadd.f32 %v912, %v1036
        %v1038 = vpop.f32.mrb[0].mxu0
        %v1039 = vpop.f32.mrb[0].mxu0
        %v1040 = vadd.f32 %v912, %v1039
        %v1041 = vpop.f32.mrb[0].mxu0
        %1042 = vmatprep.mubr.bf16.mxu0 0
        %1043 = vmatmul.mubr.bf16.gmra.mrb[0].mxu0 %v952
        %v1044 = vpop.f32.mrb[0].mxu0
        %v1045 = vadd.f32 %v912, %v1044
        %v1046 = vpop.f32.mrb[0].mxu0
        %v1047 = vpop.f32.mrb[0].mxu0
        %v1048 = vadd.f32 %v912, %v1047
        %v1049 = vpop.f32.mrb[0].mxu0
        %1050 = vmatprep.mubr.bf16.mxu0 0
        %1051 = vmatmul.mubr.bf16.gmra.mrb[0].mxu0 %v953
        %v1052 = vpop.f32.mrb[0].mxu0
        %v1053 = vadd.f32 %v912, %v1052
        %v1054 = vpop.f32.mrb[0].mxu0
        %v1055 = vpop.f32.mrb[0].mxu0
        %v1056 = vadd.f32 %v912, %v1055
        %v1057 = vpop.f32.mrb[0].mxu0
        %1058 = vdwg.mxu0
        %1059 = vst [vmem:[%s265] sm:$0xff] %v997
        %1060 = vst [vmem:[%s265 + $0x8] sm:$0xff] %v1000
        %1061 = vst [vmem:[%s265 + $0x10] sm:$0xff] %v1005
        %1062 = vst [vmem:[%s265 + $0x18] sm:$0xff] %v1008
        %1063 = vst [vmem:[%s265 + $0x20] sm:$0xff] %v1013
        %1064 = vst [vmem:[%s265 + $0x28] sm:$0xff] %v1016
        %1065 = vst [vmem:[%s265 + $0x30] sm:$0xff] %v1021
        %1066 = vst [vmem:[%s265 + $0x38] sm:$0xff] %v1024
        %1067 = vst [vmem:[%s265 + $0x40] sm:$0xff] %v1029
        %1068 = vst [vmem:[%s265 + $0x48] sm:$0xff] %v1032
        %1069 = vst [vmem:[%s265 + $0x50] sm:$0xff] %v1037
        %1070 = vst [vmem:[%s265 + $0x58] sm:$0xff] %v1040
        %1071 = vst [vmem:[%s265 + $0x60] sm:$0xff] %v1045
        %1072 = vst [vmem:[%s265 + $0x68] sm:$0xff] %v1048
        %1073 = vst [vmem:[%s265 + $0x70] sm:$0xff] %v1053
        %1074 = vst [vmem:[%s265 + $0x78] sm:$0xff] %v1056
      $region52: #{gcn_forward.1} parent=43 // pred_fallthru
        _
      %s1075 = smul.u32 16, %s22
      %p1076 = scmp.lt.s32.totalorder %s1075, 15
      %s1077 = scalar_select %p1076, %s1075, 15
      %s1078 = smul.addr %s1077, 8
      %s1079 = scalar_lea.vmem %s6, %s1078
      // Predicated region
      $region53: #{gcn_forward.1} parent=43 // pred_check
        %p1080 = pneg %p178
      $region54: #{gcn_forward.1} parent=43 // pred_check_branch
        %1082 = sbr.rel (%p1080) target = $region56
      $region55: #{gcn_forward.1} parent=43 // pred_region
        %s1083 = smul.u32 16, %s22
      $region56: #{gcn_forward.1} parent=43 // pred_fallthru
        _
      // Predicated region
      $region57: #{gcn_forward.1} parent=43 // pred_check
        %p1084 = pneg %p178
      $region58: #{gcn_forward.1} parent=43 // pred_check_branch
        %1086 = sbr.rel (%p1084) target = $region60
      $region59: #{gcn_forward.1} parent=43 // pred_region
        %s1087 = smul.u32 16, %s22
        %p1088 = scmp.lt.s32.totalorder %s1087, 15
        %s1089 = scalar_select %p1088, %s1087, 15
        %s1090 = smul.addr %s1089, 8
        %s1091 = scalar_lea.vmem %s6, %s1090
      $region60: #{gcn_forward.1} parent=43 // pred_fallthru
        _
    $region44: #{gcn_forward.1} parent=5 // pred_fallthru
      _
    %p1092 = scmp.le.s32.totalorder 2, %s12
    // Predicated region
    $region61: #{gcn_forward.1} parent=5 // pred_check
      %p1093 = pneg %p1092
    $region62: #{gcn_forward.1} parent=5 // pred_check_branch
      %1095 = sbr.rel (%p1093) target = $region64
    $region63: #{gcn_forward.1} parent=5 // pred_region
      %s1096 = ssub.s32 %s12, 2
    $region64: #{gcn_forward.1} parent=5 // pred_fallthru
      _
  $region6: #{gcn_forward.1} parent=0 // loop_footer
    %s16 = sadd.s32 1, %s12
  $region7: #{gcn_forward.1} parent=0 // loop_footer_branch
    %11 = sbr.rel target = $region3
  $region8: #{gcn_forward.1} parent=0 // loop_exit
    _

</llo_original>
